<compile_context>
chip_gen: v6e
topology: v6e:2x2x1
jax: 0.10.0
libtpu: 0.0.40
codegen_flags: <defaults>
</compile_context>

<pallas_src>
import random
import numpy as np
import jax
import jax.numpy as jnp
from jax.experimental import pallas as pl
from jax.experimental.pallas import tpu as pltpu

# ---- model / problem sizes (GIN(in_channels, out_channels, embedding_dim,
#      num_layers=2, num_sample=5)) ----
IN_CH = 128       # embedding vocab size == embedding dim == MLP in_channels
OUT_CH = 128      # out_channels
EMB_DIM = 128     # embedding_dim (3rd MLP / 3rd BN are unused in forward)
N_NODES = 8       # batch of nodes
NUM_SAMPLE = 5
EPS = 1e-5        # BatchNorm1d eps
N_BN_ROWS = 8     # 2 layers x (gamma0, beta0, gamma1, beta1)


# ----------------------------- Pallas kernel --------------------------------

def _bn_relu(x, gamma, beta):
    # PyTorch BatchNorm1d in training mode (batch stats, biased variance),
    # followed by ReLU, all in f32.  Single-pass form: the two sublane
    # reductions (E[x], E[x^2]) are independent, shortening the per-BN chain.
    mu = jnp.mean(x, axis=0, keepdims=True)
    msq = jnp.mean(x * x, axis=0, keepdims=True)
    var = jnp.maximum(msq - mu * mu, 0.0)          # guard against cancellation
    y = (x - mu) * jax.lax.rsqrt(var + EPS) * gamma + beta
    return jnp.maximum(y, 0.0)


def _gin_fused_kernel(sel_ref, par_ref, w_ref, o_ref):
    # par_ref rows: [0:128] embedding table (f32), [128:136] packed BN params.
    table = par_ref[0:IN_CH, :]                     # [128, 128] f32
    bn = par_ref[IN_CH:IN_CH + N_BN_ROWS, :]        # [8, 128]   f32

    # --- aggregation + self embedding in ONE f32 MXU matmul ---
    # h0 = emb(nodes) + mask @ emb(unique) == selector @ table
    h = jnp.dot(sel_ref[...], table, preferred_element_type=jnp.float32)

    # --- two GIN layers, fully fused.  MXU operands bf16 (f32 acc). ---
    # NOTE: linear biases omitted — each is added immediately before a
    # training-mode BatchNorm whose per-column mean subtraction cancels a
    # constant column bias exactly.
    for li in range(2):                             # static unroll
        w0 = w_ref[2 * li]                          # bf16 [D, D]
        w1 = w_ref[2 * li + 1]                      # bf16 [D, D]
        g0 = bn[4 * li + 0:4 * li + 1, :]           # f32 [1, D]
        b0 = bn[4 * li + 1:4 * li + 2, :]
        g1 = bn[4 * li + 2:4 * li + 3, :]
        b1 = bn[4 * li + 3:4 * li + 4, :]
        t = jnp.dot(h.astype(jnp.bfloat16), w0,
                    preferred_element_type=jnp.float32)
        t = _bn_relu(t, g0, b0)                     # MLP-internal BN + ReLU
        p = jnp.dot(t.astype(jnp.bfloat16), w1,
                    preferred_element_type=jnp.float32)
        h = _bn_relu(p, g1, b1)                     # GIN outer BN + ReLU

    # --- emit PyTorch's h.t() directly: [D, N] = [128, 8] ---
    # Materialized as an NT matmul (same dimension numbers as q @ k.T) against
    # an in-kernel identity: o[d, n] = sum_k eye[d, k] * h[n, k] = h[n, d].
    rows = jax.lax.broadcasted_iota(jnp.int32, (OUT_CH, OUT_CH), 0)
    cols = jax.lax.broadcasted_iota(jnp.int32, (OUT_CH, OUT_CH), 1)
    eye = (rows == cols).astype(jnp.float32)
    o_ref[...] = jax.lax.dot_general(
        eye, h, (((1,), (1,)), ((), ())), preferred_element_type=jnp.float32)


def gin_fused(selector_f32, param_slab_f32, weights_bf16):
    vmem = lambda: pl.BlockSpec(memory_space=pltpu.MemorySpace.VMEM)
    return pl.pallas_call(
        _gin_fused_kernel,
        out_shape=jax.ShapeDtypeStruct((OUT_CH, N_NODES), jnp.float32),
        in_specs=[vmem(), vmem(), vmem()],
        out_specs=vmem(),
    )(selector_f32, param_slab_f32, weights_bf16)


# --------------------------- parameter init ---------------------------------

def init_params(key):
    ks = jax.random.split(key, 16)
    table = jax.random.normal(ks[0], (IN_CH, IN_CH), jnp.float32) * 0.1

    # GIN only uses layers[0] and layers[1] in forward (self.num_layers == 2);
    # layers[2] / batch_norms[2] are constructed but never called -> not built.
    ws, bns = [], []
    ki = 1
    for _ in range(2):
        w0 = jax.random.normal(ks[ki], (IN_CH, OUT_CH), jnp.float32) * 0.05
        w1 = jax.random.normal(ks[ki + 1], (OUT_CH, OUT_CH), jnp.float32) * 0.05
        g0 = 1.0 + 0.05 * jax.random.normal(ks[ki + 2], (OUT_CH,), jnp.float32)
        b0 = 0.01 * jax.random.normal(ks[ki + 3], (OUT_CH,), jnp.float32)
        g1 = 1.0 + 0.05 * jax.random.normal(ks[ki + 4], (OUT_CH,), jnp.float32)
        b1 = 0.01 * jax.random.normal(ks[ki + 5], (OUT_CH,), jnp.float32)
        ki += 6
        ws += [w0, w1]
        bns += [g0, b0, g1, b1]

    weights = jnp.stack(ws).astype(jnp.bfloat16)            # [4, D, D] bf16
    bn_rows = jnp.stack(bns)                                 # [8, D]    f32
    param_slab = jnp.concatenate([table, bn_rows], axis=0)   # [136, D]  f32
    return param_slab, weights


# ------------------------- aggregate() glue (host) ---------------------------

def build_aggregate_mask(nodes, adj_list, num_sample, rng):
    """Faithful replication of GIN.aggregate() host-side logic (including its
    enumerate()-based column indexing).  Returns mask [N,U] and unique list."""
    sampled_neighbors = []
    unique_neighbors = set()
    for node in nodes:
        if len(adj_list[node]) >= num_sample:
            neighbors = set(rng.sample(sorted(adj_list[node]), num_sample))
        else:
            neighbors = set(adj_list[node])
        neighbors.add(node)
        sampled_neighbors.append(neighbors)
        unique_neighbors = unique_neighbors.union(neighbors)
    column_indices = [i for neighbor in sampled_neighbors
                      for i, n in enumerate(neighbor)]
    row_indices = [i for i in range(len(sampled_neighbors))
                   for _ in range(len(sampled_neighbors[i]))]
    unique_list = list(unique_neighbors)
    mask = np.zeros((len(sampled_neighbors), len(unique_list)), np.float32)
    mask[row_indices, column_indices] = 1.0
    return mask, unique_list


def build_selector(nodes, adj_list, num_sample, rng):
    """Combined selector such that  selector @ table
       == emb(nodes) + mask @ emb(unique)   (the reference aggregation).
    Column c of the (position-indexed) mask multiplies emb(unique_list[c]),
    so it is scattered onto vocab column unique_list[c]; unique_list entries
    are distinct, so the scatter-add is exact (values are 0/1/2)."""
    mask, unique_list = build_aggregate_mask(nodes, adj_list, num_sample, rng)
    sel = np.zeros((len(nodes), IN_CH), np.float32)
    sel[np.arange(len(nodes)), np.asarray(nodes, np.int64)] = 1.0
    sel[:, np.asarray(unique_list, np.int64)] += mask
    return sel


# ------------------------------ GIN forward ----------------------------------

@jax.jit
def _gin_forward_device(selector, param_slab, weights_bf16):
    # Exactly one device op: the fused Pallas kernel (output already [D, N]).
    return gin_fused(selector, param_slab, weights_bf16)


def gin_forward(nodes, adj_list, param_slab, weights_bf16, rng):
    sel = build_selector(nodes, adj_list, NUM_SAMPLE, rng)
    return _gin_forward_device(jnp.asarray(sel), param_slab, weights_bf16)


# ----------------------------------- main ------------------------------------

if __name__ == "__main__":
    key = jax.random.PRNGKey(0)
    param_slab, weights_bf16 = init_params(key)

    # deterministic synthetic graph
    rng = random.Random(0)
    nodes = [3, 7, 12, 25, 40, 63, 90, 127]
    adj_list = {v: {(v * 7 + k) % IN_CH for k in range(1, 8)} - {v}
                for v in range(IN_CH)}

    out = gin_forward(nodes, adj_list, param_slab, weights_bf16, rng)
    out = jax.block_until_ready(out)
    assert out.shape == (OUT_CH, N_NODES)
    assert bool(jnp.all(jnp.isfinite(out)))
    print("KERNEL_OK")
</pallas_src>

<mosaic_0001>
module attributes {stable_mosaic.version = 11 : i64} {
  func.func @_gin_fused_kernel(%arg0: memref<8x128xf32, #tpu.memory_space<vmem>>, %arg1: memref<136x128xf32, #tpu.memory_space<vmem>>, %arg2: memref<4x128x128xbf16, #tpu.memory_space<vmem>>, %arg3: memref<128x8xf32, #tpu.memory_space<vmem>>) attributes {dimension_semantics = [], scalar_prefetch = 0 : i64, scratch_operands = 0 : i64, tpu.core_type = #tpu.core_type<tc>} {
    %c0 = arith.constant 0 : index
    %c0_0 = arith.constant 0 : index
    %0 = vector.load %arg1[%c0, %c0_0] : memref<136x128xf32, #tpu.memory_space<vmem>>, vector<128x128xf32>
    %c128 = arith.constant 128 : index
    %c0_1 = arith.constant 0 : index
    %1 = vector.load %arg1[%c128, %c0_1] : memref<136x128xf32, #tpu.memory_space<vmem>>, vector<8x128xf32>
    %c0_2 = arith.constant 0 : index
    %c0_3 = arith.constant 0 : index
    %2 = vector.load %arg0[%c0_2, %c0_3] : memref<8x128xf32, #tpu.memory_space<vmem>>, vector<8x128xf32>
    %cst = arith.constant dense<0.000000e+00> : vector<8x128xf32>
    %3 = tpu.matmul %2, %0, %cst {dimension_numbers = #tpu.dot_dimension_numbers<[1], [0], [0], [1], [0, 0, 1, 1], [], []>} : vector<8x128xf32>, vector<128x128xf32>, vector<8x128xf32> -> vector<8x128xf32>
    %c0_4 = arith.constant 0 : index
    %c0_5 = arith.constant 0 : index
    %c0_6 = arith.constant 0 : index
    %4 = vector.load %arg2[%c0_4, %c0_5, %c0_6] : memref<4x128x128xbf16, #tpu.memory_space<vmem>>, vector<1x128x128xbf16>
    %5 = vector.shape_cast %4 : vector<1x128x128xbf16> to vector<128x128xbf16>
    %c1 = arith.constant 1 : index
    %c0_7 = arith.constant 0 : index
    %c0_8 = arith.constant 0 : index
    %6 = vector.load %arg2[%c1, %c0_7, %c0_8] : memref<4x128x128xbf16, #tpu.memory_space<vmem>>, vector<1x128x128xbf16>
    %7 = vector.shape_cast %6 : vector<1x128x128xbf16> to vector<128x128xbf16>
    %8 = vector.extract_strided_slice %1 {offsets = [0, 0], sizes = [1, 128], strides = [1, 1]} : vector<8x128xf32> to vector<1x128xf32>
    %9 = vector.extract_strided_slice %1 {offsets = [1, 0], sizes = [1, 128], strides = [1, 1]} : vector<8x128xf32> to vector<1x128xf32>
    %10 = vector.extract_strided_slice %1 {offsets = [2, 0], sizes = [1, 128], strides = [1, 1]} : vector<8x128xf32> to vector<1x128xf32>
    %11 = vector.extract_strided_slice %1 {offsets = [3, 0], sizes = [1, 128], strides = [1, 1]} : vector<8x128xf32> to vector<1x128xf32>
    %12 = arith.truncf %3 : vector<8x128xf32> to vector<8x128xbf16>
    %cst_9 = arith.constant dense<0.000000e+00> : vector<8x128xf32>
    %13 = tpu.matmul %12, %5, %cst_9 {dimension_numbers = #tpu.dot_dimension_numbers<[1], [0], [0], [1], [0, 0, 1, 1], [], []>} : vector<8x128xbf16>, vector<128x128xbf16>, vector<8x128xf32> -> vector<8x128xf32>
    %cst_10 = arith.constant dense<0.000000e+00> : vector<128xf32>
    %14 = vector.multi_reduction <add>, %13, %cst_10 [0] : vector<8x128xf32> to vector<128xf32>
    %15 = vector.shape_cast %14 : vector<128xf32> to vector<1x128xf32>
    %cst_11 = arith.constant 8.000000e+00 : f32
    %16 = vector.broadcast %cst_11 : f32 to vector<1x128xf32>
    %17 = arith.divf %15, %16 : vector<1x128xf32>
    %18 = arith.mulf %13, %13 : vector<8x128xf32>
    %cst_12 = arith.constant dense<0.000000e+00> : vector<128xf32>
    %19 = vector.multi_reduction <add>, %18, %cst_12 [0] : vector<8x128xf32> to vector<128xf32>
    %20 = vector.shape_cast %19 : vector<128xf32> to vector<1x128xf32>
    %cst_13 = arith.constant 8.000000e+00 : f32
    %21 = vector.broadcast %cst_13 : f32 to vector<1x128xf32>
    %22 = arith.divf %20, %21 : vector<1x128xf32>
    %23 = arith.mulf %17, %17 : vector<1x128xf32>
    %24 = arith.subf %22, %23 : vector<1x128xf32>
    %cst_14 = arith.constant 0.000000e+00 : f32
    %25 = vector.broadcast %cst_14 : f32 to vector<1x128xf32>
    %26 = arith.maximumf %24, %25 : vector<1x128xf32>
    %27 = vector.broadcast %17 : vector<1x128xf32> to vector<8x128xf32>
    %28 = arith.subf %13, %27 : vector<8x128xf32>
    %cst_15 = arith.constant 9.99999974E-6 : f32
    %29 = vector.broadcast %cst_15 : f32 to vector<1x128xf32>
    %30 = arith.addf %26, %29 : vector<1x128xf32>
    %31 = math.rsqrt %30 : vector<1x128xf32>
    %32 = vector.broadcast %31 : vector<1x128xf32> to vector<8x128xf32>
    %33 = arith.mulf %28, %32 : vector<8x128xf32>
    %34 = vector.broadcast %8 : vector<1x128xf32> to vector<8x128xf32>
    %35 = arith.mulf %33, %34 : vector<8x128xf32>
    %36 = vector.broadcast %9 : vector<1x128xf32> to vector<8x128xf32>
    %37 = arith.addf %35, %36 : vector<8x128xf32>
    %cst_16 = arith.constant 0.000000e+00 : f32
    %38 = vector.broadcast %cst_16 : f32 to vector<8x128xf32>
    %39 = arith.maximumf %37, %38 : vector<8x128xf32>
    %40 = arith.truncf %39 : vector<8x128xf32> to vector<8x128xbf16>
    %cst_17 = arith.constant dense<0.000000e+00> : vector<8x128xf32>
    %41 = tpu.matmul %40, %7, %cst_17 {dimension_numbers = #tpu.dot_dimension_numbers<[1], [0], [0], [1], [0, 0, 1, 1], [], []>} : vector<8x128xbf16>, vector<128x128xbf16>, vector<8x128xf32> -> vector<8x128xf32>
    %cst_18 = arith.constant dense<0.000000e+00> : vector<128xf32>
    %42 = vector.multi_reduction <add>, %41, %cst_18 [0] : vector<8x128xf32> to vector<128xf32>
    %43 = vector.shape_cast %42 : vector<128xf32> to vector<1x128xf32>
    %cst_19 = arith.constant 8.000000e+00 : f32
    %44 = vector.broadcast %cst_19 : f32 to vector<1x128xf32>
    %45 = arith.divf %43, %44 : vector<1x128xf32>
    %46 = arith.mulf %41, %41 : vector<8x128xf32>
    %cst_20 = arith.constant dense<0.000000e+00> : vector<128xf32>
    %47 = vector.multi_reduction <add>, %46, %cst_20 [0] : vector<8x128xf32> to vector<128xf32>
    %48 = vector.shape_cast %47 : vector<128xf32> to vector<1x128xf32>
    %cst_21 = arith.constant 8.000000e+00 : f32
    %49 = vector.broadcast %cst_21 : f32 to vector<1x128xf32>
    %50 = arith.divf %48, %49 : vector<1x128xf32>
    %51 = arith.mulf %45, %45 : vector<1x128xf32>
    %52 = arith.subf %50, %51 : vector<1x128xf32>
    %cst_22 = arith.constant 0.000000e+00 : f32
    %53 = vector.broadcast %cst_22 : f32 to vector<1x128xf32>
    %54 = arith.maximumf %52, %53 : vector<1x128xf32>
    %55 = vector.broadcast %45 : vector<1x128xf32> to vector<8x128xf32>
    %56 = arith.subf %41, %55 : vector<8x128xf32>
    %cst_23 = arith.constant 9.99999974E-6 : f32
    %57 = vector.broadcast %cst_23 : f32 to vector<1x128xf32>
    %58 = arith.addf %54, %57 : vector<1x128xf32>
    %59 = math.rsqrt %58 : vector<1x128xf32>
    %60 = vector.broadcast %59 : vector<1x128xf32> to vector<8x128xf32>
    %61 = arith.mulf %56, %60 : vector<8x128xf32>
    %62 = vector.broadcast %10 : vector<1x128xf32> to vector<8x128xf32>
    %63 = arith.mulf %61, %62 : vector<8x128xf32>
    %64 = vector.broadcast %11 : vector<1x128xf32> to vector<8x128xf32>
    %65 = arith.addf %63, %64 : vector<8x128xf32>
    %cst_24 = arith.constant 0.000000e+00 : f32
    %66 = vector.broadcast %cst_24 : f32 to vector<8x128xf32>
    %67 = arith.maximumf %65, %66 : vector<8x128xf32>
    %c2 = arith.constant 2 : index
    %c0_25 = arith.constant 0 : index
    %c0_26 = arith.constant 0 : index
    %68 = vector.load %arg2[%c2, %c0_25, %c0_26] : memref<4x128x128xbf16, #tpu.memory_space<vmem>>, vector<1x128x128xbf16>
    %69 = vector.shape_cast %68 : vector<1x128x128xbf16> to vector<128x128xbf16>
    %c3 = arith.constant 3 : index
    %c0_27 = arith.constant 0 : index
    %c0_28 = arith.constant 0 : index
    %70 = vector.load %arg2[%c3, %c0_27, %c0_28] : memref<4x128x128xbf16, #tpu.memory_space<vmem>>, vector<1x128x128xbf16>
    %71 = vector.shape_cast %70 : vector<1x128x128xbf16> to vector<128x128xbf16>
    %72 = vector.extract_strided_slice %1 {offsets = [4, 0], sizes = [1, 128], strides = [1, 1]} : vector<8x128xf32> to vector<1x128xf32>
    %73 = vector.extract_strided_slice %1 {offsets = [5, 0], sizes = [1, 128], strides = [1, 1]} : vector<8x128xf32> to vector<1x128xf32>
    %74 = vector.extract_strided_slice %1 {offsets = [6, 0], sizes = [1, 128], strides = [1, 1]} : vector<8x128xf32> to vector<1x128xf32>
    %75 = vector.extract_strided_slice %1 {offsets = [7, 0], sizes = [1, 128], strides = [1, 1]} : vector<8x128xf32> to vector<1x128xf32>
    %76 = arith.truncf %67 : vector<8x128xf32> to vector<8x128xbf16>
    %cst_29 = arith.constant dense<0.000000e+00> : vector<8x128xf32>
    %77 = tpu.matmul %76, %69, %cst_29 {dimension_numbers = #tpu.dot_dimension_numbers<[1], [0], [0], [1], [0, 0, 1, 1], [], []>} : vector<8x128xbf16>, vector<128x128xbf16>, vector<8x128xf32> -> vector<8x128xf32>
    %cst_30 = arith.constant dense<0.000000e+00> : vector<128xf32>
    %78 = vector.multi_reduction <add>, %77, %cst_30 [0] : vector<8x128xf32> to vector<128xf32>
    %79 = vector.shape_cast %78 : vector<128xf32> to vector<1x128xf32>
    %cst_31 = arith.constant 8.000000e+00 : f32
    %80 = vector.broadcast %cst_31 : f32 to vector<1x128xf32>
    %81 = arith.divf %79, %80 : vector<1x128xf32>
    %82 = arith.mulf %77, %77 : vector<8x128xf32>
    %cst_32 = arith.constant dense<0.000000e+00> : vector<128xf32>
    %83 = vector.multi_reduction <add>, %82, %cst_32 [0] : vector<8x128xf32> to vector<128xf32>
    %84 = vector.shape_cast %83 : vector<128xf32> to vector<1x128xf32>
    %cst_33 = arith.constant 8.000000e+00 : f32
    %85 = vector.broadcast %cst_33 : f32 to vector<1x128xf32>
    %86 = arith.divf %84, %85 : vector<1x128xf32>
    %87 = arith.mulf %81, %81 : vector<1x128xf32>
    %88 = arith.subf %86, %87 : vector<1x128xf32>
    %cst_34 = arith.constant 0.000000e+00 : f32
    %89 = vector.broadcast %cst_34 : f32 to vector<1x128xf32>
    %90 = arith.maximumf %88, %89 : vector<1x128xf32>
    %91 = vector.broadcast %81 : vector<1x128xf32> to vector<8x128xf32>
    %92 = arith.subf %77, %91 : vector<8x128xf32>
    %cst_35 = arith.constant 9.99999974E-6 : f32
    %93 = vector.broadcast %cst_35 : f32 to vector<1x128xf32>
    %94 = arith.addf %90, %93 : vector<1x128xf32>
    %95 = math.rsqrt %94 : vector<1x128xf32>
    %96 = vector.broadcast %95 : vector<1x128xf32> to vector<8x128xf32>
    %97 = arith.mulf %92, %96 : vector<8x128xf32>
    %98 = vector.broadcast %72 : vector<1x128xf32> to vector<8x128xf32>
    %99 = arith.mulf %97, %98 : vector<8x128xf32>
    %100 = vector.broadcast %73 : vector<1x128xf32> to vector<8x128xf32>
    %101 = arith.addf %99, %100 : vector<8x128xf32>
    %cst_36 = arith.constant 0.000000e+00 : f32
    %102 = vector.broadcast %cst_36 : f32 to vector<8x128xf32>
    %103 = arith.maximumf %101, %102 : vector<8x128xf32>
    %104 = arith.truncf %103 : vector<8x128xf32> to vector<8x128xbf16>
    %cst_37 = arith.constant dense<0.000000e+00> : vector<8x128xf32>
    %105 = tpu.matmul %104, %71, %cst_37 {dimension_numbers = #tpu.dot_dimension_numbers<[1], [0], [0], [1], [0, 0, 1, 1], [], []>} : vector<8x128xbf16>, vector<128x128xbf16>, vector<8x128xf32> -> vector<8x128xf32>
    %cst_38 = arith.constant dense<0.000000e+00> : vector<128xf32>
    %106 = vector.multi_reduction <add>, %105, %cst_38 [0] : vector<8x128xf32> to vector<128xf32>
    %107 = vector.shape_cast %106 : vector<128xf32> to vector<1x128xf32>
    %cst_39 = arith.constant 8.000000e+00 : f32
    %108 = vector.broadcast %cst_39 : f32 to vector<1x128xf32>
    %109 = arith.divf %107, %108 : vector<1x128xf32>
    %110 = arith.mulf %105, %105 : vector<8x128xf32>
    %cst_40 = arith.constant dense<0.000000e+00> : vector<128xf32>
    %111 = vector.multi_reduction <add>, %110, %cst_40 [0] : vector<8x128xf32> to vector<128xf32>
    %112 = vector.shape_cast %111 : vector<128xf32> to vector<1x128xf32>
    %cst_41 = arith.constant 8.000000e+00 : f32
    %113 = vector.broadcast %cst_41 : f32 to vector<1x128xf32>
    %114 = arith.divf %112, %113 : vector<1x128xf32>
    %115 = arith.mulf %109, %109 : vector<1x128xf32>
    %116 = arith.subf %114, %115 : vector<1x128xf32>
    %cst_42 = arith.constant 0.000000e+00 : f32
    %117 = vector.broadcast %cst_42 : f32 to vector<1x128xf32>
    %118 = arith.maximumf %116, %117 : vector<1x128xf32>
    %119 = vector.broadcast %109 : vector<1x128xf32> to vector<8x128xf32>
    %120 = arith.subf %105, %119 : vector<8x128xf32>
    %cst_43 = arith.constant 9.99999974E-6 : f32
    %121 = vector.broadcast %cst_43 : f32 to vector<1x128xf32>
    %122 = arith.addf %118, %121 : vector<1x128xf32>
    %123 = math.rsqrt %122 : vector<1x128xf32>
    %124 = vector.broadcast %123 : vector<1x128xf32> to vector<8x128xf32>
    %125 = arith.mulf %120, %124 : vector<8x128xf32>
    %126 = vector.broadcast %74 : vector<1x128xf32> to vector<8x128xf32>
    %127 = arith.mulf %125, %126 : vector<8x128xf32>
    %128 = vector.broadcast %75 : vector<1x128xf32> to vector<8x128xf32>
    %129 = arith.addf %127, %128 : vector<8x128xf32>
    %cst_44 = arith.constant 0.000000e+00 : f32
    %130 = vector.broadcast %cst_44 : f32 to vector<8x128xf32>
    %131 = arith.maximumf %129, %130 : vector<8x128xf32>
    %132 = tpu.iota {dimensions = array<i32: 0>} : vector<128x128xi32>
    %133 = tpu.iota {dimensions = array<i32: 1>} : vector<128x128xi32>
    %134 = arith.cmpi eq, %132, %133 : vector<128x128xi32>
    %135 = arith.extui %134 : vector<128x128xi1> to vector<128x128xi32>
    %136 = arith.sitofp %135 : vector<128x128xi32> to vector<128x128xf32>
    %cst_45 = arith.constant dense<0.000000e+00> : vector<128x8xf32>
    %137 = tpu.matmul %136, %131, %cst_45 {dimension_numbers = #tpu.dot_dimension_numbers<[1], [1], [0], [0], [0, 0, 1, 0], [], []>} : vector<128x128xf32>, vector<8x128xf32>, vector<128x8xf32> -> vector<128x8xf32>
    %c0_46 = arith.constant 0 : index
    %c0_47 = arith.constant 0 : index
    %138 = vector.load %arg3[%c0_46, %c0_47] : memref<128x8xf32, #tpu.memory_space<vmem>>, vector<128x8xf32>
    tpu.vector_store %arg3[%c0_46, %c0_47], %137 {strides = array<i32>} : memref<128x8xf32, #tpu.memory_space<vmem>>, vector<128x8xf32>,
    return
  }
}

</mosaic_0001>

<llo_original>
// kernel: _gin_forward_device.1
$region0: #{_gin_forward_device.1}
  #allocation0 [shape = 'u32[]', space=smem, size = 0x4, offset = 0x4, fixed_abs, tag = 'smem constant byte address 0x4 - core index']
  #allocation1 [shape = 'u32[144,128]{1,0:T(1,128)}', space=vmem, size = 0x12000, scoped, tag = 'internal scratch']
  %s0 = inlined_call_operand.hbm [shape: f32[8,128], index: 0, kind: input, shape index: {}]
  %s1 = inlined_call_operand.hbm [shape: f32[136,128], index: 1, kind: input, shape index: {}]
  %s2 = inlined_call_operand.hbm [shape: bf16[4,128,128], index: 2, kind: input, shape index: {}]
  %s3 = inlined_call_operand.vmem [shape: f32[128,8], index: 3, kind: output, shape index: {}]
  %s4 = sld [smem:[#allocation0]]
  $region34: #{_gin_forward_device.1} parent=0
    _
  %s6 = ssub.s32 1, %s4
  %s7 = scalar_select 0, %s6, %s4
  $region1: #{_gin_forward_device.1} parent=0
    #allocation2 [shape = 'u8[4096]{0}', space=vmem, size = 0x1000, scoped, tag = 'input window, operand 0, single buffered']
    #allocation3 [shape = 's32[1]{0}', space=sflag, size = 0x4, scoped, tag = 'scoped memory for _gin_forward_device.1']
    #allocation4 [shape = 'u8[69632]{0}', space=vmem, size = 0x11000, scoped, tag = 'input window, operand 1, single buffered']
    #allocation5 [shape = 's32[1]{0}', space=sflag, size = 0x4, scoped, tag = 'scoped memory for _gin_forward_device.1']
    #allocation6 [shape = 'u8[131072]{0}', space=vmem, size = 0x20000, scoped, tag = 'input window, operand 2, single buffered']
    %8 = vsyncpa [#allocation3], 0
    %9 = vsyncpa [#allocation5], 0
    // Predicated region
    $region2: #{_gin_forward_device.1} parent=1 // pred_check
      _
    $region3: #{_gin_forward_device.1} parent=1 // pred_check_branch
      %11 = sbr.rel (0) target = $region5
    $region4: #{_gin_forward_device.1} parent=1 // pred_region
      %s13 = ssub.s32 128, 128
      %14 = vsyncadd [#allocation3], %s13
      %s16 = sshll.u32 [#allocation2], 4
      %s17 = int_to_ptr.vmem [resolvable:$true] %s16
      %19 = dma.hbm_to_vmem [thread:$0]  %s0, 128, %s17, [#allocation3]
    $region5: #{_gin_forward_device.1} parent=1 // pred_fallthru
      _
    // Predicated region
    $region6: #{_gin_forward_device.1} parent=1 // pred_check
      _
    $region7: #{_gin_forward_device.1} parent=1 // pred_check_branch
      %21 = sbr.rel (0) target = $region9
    $region8: #{_gin_forward_device.1} parent=1 // pred_region
      %s23 = ssub.s32 2176, 2176
      %24 = vsyncadd [#allocation5], %s23
      %s25 = sshll.u32 [#allocation4], 4
      %s26 = int_to_ptr.vmem [resolvable:$true] %s25
      %31 = dma.hbm_to_vmem [thread:$0]  %s1, 2176, %s26, [#allocation5], 128, 128, 8
    $region9: #{_gin_forward_device.1} parent=1 // pred_fallthru
      _
    // Predicated region
    $region10: #{_gin_forward_device.1} parent=1 // pred_check
      _
    $region11: #{_gin_forward_device.1} parent=1 // pred_check_branch
      %33 = sbr.rel (0) target = $region13
    $region12: #{_gin_forward_device.1} parent=1 // pred_region
      %s35 = ssub.s32 4096, 4096
      %36 = vsyncadd [#allocation5], %s35
      %s37 = sshll.u32 [#allocation6], 4
      %s38 = int_to_ptr.vmem [resolvable:$true] %s37
      %43 = dma.hbm_to_vmem [thread:$0]  %s2, 4096, %s38, [#allocation5], 64, 64, 4
    $region13: #{_gin_forward_device.1} parent=1 // pred_fallthru
      _
    // Predicated region
    $region14: #{_gin_forward_device.1} parent=1 // pred_check
      _
    $region15: #{_gin_forward_device.1} parent=1 // pred_check_branch
      %45 = sbr.rel (0) target = $region17
    $region16: #{_gin_forward_device.1} parent=1 // pred_region
      %46 = dma.done [#allocation3], 128
    $region17: #{_gin_forward_device.1} parent=1 // pred_fallthru
      _
    // Predicated region
    $region18: #{_gin_forward_device.1} parent=1 // pred_check
      _
    $region19: #{_gin_forward_device.1} parent=1 // pred_check_branch
      %48 = sbr.rel (0) target = $region21
    $region20: #{_gin_forward_device.1} parent=1 // pred_region
      %49 = dma.done [#allocation5], 2176
    $region21: #{_gin_forward_device.1} parent=1 // pred_fallthru
      _
    // Predicated region
    $region22: #{_gin_forward_device.1} parent=1 // pred_check
      _
    $region23: #{_gin_forward_device.1} parent=1 // pred_check_branch
      %51 = sbr.rel (0) target = $region25
    $region24: #{_gin_forward_device.1} parent=1 // pred_region
      %52 = dma.done [#allocation5], 4096
    $region25: #{_gin_forward_device.1} parent=1 // pred_fallthru
      _
    %v54 = vld [vmem:[#allocation4] sm:$0xff]
    %v55 = vld [vmem:[#allocation4 + $0x8] sm:$0xff]
    %v56 = vld [vmem:[#allocation4 + $0x10] sm:$0xff]
    %v57 = vld [vmem:[#allocation4 + $0x18] sm:$0xff]
    %v58 = vld [vmem:[#allocation4 + $0x20] sm:$0xff]
    %v59 = vld [vmem:[#allocation4 + $0x28] sm:$0xff]
    %v60 = vld [vmem:[#allocation4 + $0x30] sm:$0xff]
    %v61 = vld [vmem:[#allocation4 + $0x38] sm:$0xff]
    %v62 = vld [vmem:[#allocation4 + $0x40] sm:$0xff]
    %v63 = vld [vmem:[#allocation4 + $0x48] sm:$0xff]
    %v64 = vld [vmem:[#allocation4 + $0x50] sm:$0xff]
    %v65 = vld [vmem:[#allocation4 + $0x58] sm:$0xff]
    %v66 = vld [vmem:[#allocation4 + $0x60] sm:$0xff]
    %v67 = vld [vmem:[#allocation4 + $0x68] sm:$0xff]
    %v68 = vld [vmem:[#allocation4 + $0x70] sm:$0xff]
    %v69 = vld [vmem:[#allocation4 + $0x78] sm:$0xff]
    %v70 = vld [vmem:[#allocation4 + $0x80] sm:$0xff]
    %v71 = vld [vmem:[#allocation2] sm:$0xff]
    %72 = vmatprep.subr.mxu0 0.0
    %73 = vmatpush1.msra.mxu0 %v69
    %74 = vmatprep.subr.mxu0 0.0
    %75 = vmatpush1.msra.mxu0 %v68
    %76 = vmatprep.subr.mxu0 0.0
    %77 = vmatpush1.msra.mxu0 %v67
    %78 = vmatprep.subr.mxu0 0.0
    %79 = vmatpush1.msra.mxu0 %v66
    %80 = vmatprep.subr.mxu0 0.0
    %81 = vmatpush1.msra.mxu0 %v65
    %82 = vmatprep.subr.mxu0 0.0
    %83 = vmatpush1.msra.mxu0 %v64
    %84 = vmatprep.subr.mxu0 0.0
    %85 = vmatpush1.msra.mxu0 %v63
    %86 = vmatprep.subr.mxu0 0.0
    %87 = vmatpush1.msra.mxu0 %v62
    %88 = vmatprep.subr.mxu0 0.0
    %89 = vmatpush1.msra.mxu0 %v61
    %90 = vmatprep.subr.mxu0 0.0
    %91 = vmatpush1.msra.mxu0 %v60
    %92 = vmatprep.subr.mxu0 0.0
    %93 = vmatpush1.msra.mxu0 %v59
    %94 = vmatprep.subr.mxu0 0.0
    %95 = vmatpush1.msra.mxu0 %v58
    %96 = vmatprep.subr.mxu0 0.0
    %97 = vmatpush1.msra.mxu0 %v57
    %98 = vmatprep.subr.mxu0 0.0
    %99 = vmatpush1.msra.mxu0 %v56
    %100 = vmatprep.subr.mxu0 0.0
    %101 = vmatpush1.msra.mxu0 %v55
    %102 = vmatprep.subr.mxu0 0.0
    %103 = vmatpush1.msra.mxu0 %v54
    %104 = vmatprep.subr.mxu0 0.0
    %105 = vmatpush2.msra.mxu0 0.0
    %106 = vmatprep.subr.mxu0 0.0
    %107 = vmatpush2.msra.mxu0 0.0
    %108 = vmatprep.subr.mxu0 0.0
    %109 = vmatpush2.msra.mxu0 0.0
    %110 = vmatprep.subr.mxu0 0.0
    %111 = vmatpush2.msra.mxu0 0.0
    %112 = vmatprep.subr.mxu0 0.0
    %113 = vmatpush2.msra.mxu0 0.0
    %114 = vmatprep.subr.mxu0 0.0
    %115 = vmatpush2.msra.mxu0 0.0
    %116 = vmatprep.subr.mxu0 0.0
    %117 = vmatpush2.msra.mxu0 0.0
    %118 = vmatprep.subr.mxu0 0.0
    %119 = vmatpush2.msra.mxu0 0.0
    %120 = vmatprep.subr.mxu0 0.0
    %121 = vmatpush2.msra.mxu0 0.0
    %122 = vmatprep.subr.mxu0 0.0
    %123 = vmatpush2.msra.mxu0 0.0
    %124 = vmatprep.subr.mxu0 0.0
    %125 = vmatpush2.msra.mxu0 0.0
    %126 = vmatprep.subr.mxu0 0.0
    %127 = vmatpush2.msra.mxu0 0.0
    %128 = vmatprep.subr.mxu0 0.0
    %129 = vmatpush2.msra.mxu0 0.0
    %130 = vmatprep.subr.mxu0 0.0
    %131 = vmatpush2.msra.mxu0 0.0
    %132 = vmatprep.subr.mxu0 0.0
    %133 = vmatpush2.msra.mxu0 0.0
    %134 = vmatprep.subr.mxu0 0.0
    %135 = vmatpush2.msra.mxu0 0.0
    %136 = vmatprep.mubr.f32.mxu0 0.0
    %137 = vmatmul.mubr.f32.gmra.mxu0 %v71
    %v138 = vpop.f32.mrf.mxu0
    %v139 = vadd.f32 0.0, %v138
    %v140 = vpop.f32.mrf.mxu0
    %141 = vdwg.mxu0
    %v142 = vld [vmem:[#allocation6] sm:$0xf]
    %v143 = vld [vmem:[#allocation6 + $0x4] sm:$0xf]
    %v144 = vld [vmem:[#allocation6 + $0x8] sm:$0xf]
    %v145 = vld [vmem:[#allocation6 + $0xc] sm:$0xf]
    %v146 = vld [vmem:[#allocation6 + $0x10] sm:$0xf]
    %v147 = vld [vmem:[#allocation6 + $0x14] sm:$0xf]
    %v148 = vld [vmem:[#allocation6 + $0x18] sm:$0xf]
    %v149 = vld [vmem:[#allocation6 + $0x1c] sm:$0xf]
    %v150 = vld [vmem:[#allocation6 + $0x20] sm:$0xf]
    %v151 = vld [vmem:[#allocation6 + $0x24] sm:$0xf]
    %v152 = vld [vmem:[#allocation6 + $0x28] sm:$0xf]
    %v153 = vld [vmem:[#allocation6 + $0x2c] sm:$0xf]
    %v154 = vld [vmem:[#allocation6 + $0x30] sm:$0xf]
    %v155 = vld [vmem:[#allocation6 + $0x34] sm:$0xf]
    %v156 = vld [vmem:[#allocation6 + $0x38] sm:$0xf]
    %v157 = vld [vmem:[#allocation6 + $0x3c] sm:$0xf]
    %s158 = scalar_lea.vmem [#allocation6], 64
    %v159 = vld [vmem:[%s158] sm:$0xf]
    %v160 = vld [vmem:[%s158 + $0x4] sm:$0xf]
    %v161 = vld [vmem:[%s158 + $0x8] sm:$0xf]
    %v162 = vld [vmem:[%s158 + $0xc] sm:$0xf]
    %v163 = vld [vmem:[%s158 + $0x10] sm:$0xf]
    %v164 = vld [vmem:[%s158 + $0x14] sm:$0xf]
    %v165 = vld [vmem:[%s158 + $0x18] sm:$0xf]
    %v166 = vld [vmem:[%s158 + $0x1c] sm:$0xf]
    %v167 = vld [vmem:[%s158 + $0x20] sm:$0xf]
    %v168 = vld [vmem:[%s158 + $0x24] sm:$0xf]
    %v169 = vld [vmem:[%s158 + $0x28] sm:$0xf]
    %v170 = vld [vmem:[%s158 + $0x2c] sm:$0xf]
    %v171 = vld [vmem:[%s158 + $0x30] sm:$0xf]
    %v172 = vld [vmem:[%s158 + $0x34] sm:$0xf]
    %v173 = vld [vmem:[%s158 + $0x38] sm:$0xf]
    %v174 = vld [vmem:[%s158 + $0x3c] sm:$0xf]
    %v175 = vpack.c.bf16 %v139, %v139
    %v192 = vunpack.c.l.b16 %v142
    %v193 = vunpack.c.l.b16 %v143
    %v194 = vunpack.c.l.b16 %v144
    %v195 = vunpack.c.l.b16 %v145
    %v196 = vunpack.c.l.b16 %v146
    %v197 = vunpack.c.l.b16 %v147
    %v198 = vunpack.c.l.b16 %v148
    %v199 = vunpack.c.l.b16 %v149
    %v200 = vunpack.c.l.b16 %v150
    %v201 = vunpack.c.l.b16 %v151
    %v202 = vunpack.c.l.b16 %v152
    %v203 = vunpack.c.l.b16 %v153
    %v204 = vunpack.c.l.b16 %v154
    %v205 = vunpack.c.l.b16 %v155
    %v206 = vunpack.c.l.b16 %v156
    %v207 = vunpack.c.l.b16 %v157
    %v208 = vpack.c.b16 %v193, %v192
    %v209 = vpack.c.b16 %v195, %v194
    %v210 = vpack.c.b16 %v197, %v196
    %v211 = vpack.c.b16 %v199, %v198
    %v212 = vpack.c.b16 %v201, %v200
    %v213 = vpack.c.b16 %v203, %v202
    %v214 = vpack.c.b16 %v205, %v204
    %v215 = vpack.c.b16 %v207, %v206
    %224 = vmatprep.subr.bf16.mxu0 0
    %225 = vmatpush1.bf16.msra.mxu0 %v215
    %226 = vmatprep.subr.bf16.mxu0 0
    %227 = vmatpush1.bf16.msra.mxu0 %v214
    %228 = vmatprep.subr.bf16.mxu0 0
    %229 = vmatpush1.bf16.msra.mxu0 %v213
    %230 = vmatprep.subr.bf16.mxu0 0
    %231 = vmatpush1.bf16.msra.mxu0 %v212
    %232 = vmatprep.subr.bf16.mxu0 0
    %233 = vmatpush1.bf16.msra.mxu0 %v211
    %234 = vmatprep.subr.bf16.mxu0 0
    %235 = vmatpush1.bf16.msra.mxu0 %v210
    %236 = vmatprep.subr.bf16.mxu0 0
    %237 = vmatpush1.bf16.msra.mxu0 %v209
    %238 = vmatprep.subr.bf16.mxu0 0
    %239 = vmatpush1.bf16.msra.mxu0 %v208
    %240 = vmatprep.subr.bf16.mxu0 0
    %241 = vmatpush2.bf16.msra.mxu0 0
    %242 = vmatprep.subr.bf16.mxu0 0
    %243 = vmatpush2.bf16.msra.mxu0 0
    %244 = vmatprep.subr.bf16.mxu0 0
    %245 = vmatpush2.bf16.msra.mxu0 0
    %246 = vmatprep.subr.bf16.mxu0 0
    %247 = vmatpush2.bf16.msra.mxu0 0
    %248 = vmatprep.subr.bf16.mxu0 0
    %249 = vmatpush2.bf16.msra.mxu0 0
    %250 = vmatprep.subr.bf16.mxu0 0
    %251 = vmatpush2.bf16.msra.mxu0 0
    %252 = vmatprep.subr.bf16.mxu0 0
    %253 = vmatpush2.bf16.msra.mxu0 0
    %254 = vmatprep.subr.bf16.mxu0 0
    %255 = vmatpush2.bf16.msra.mxu0 0
    %256 = vmatprep.mubr.bf16.mxu0 0
    %257 = vmatmul.mubr.bf16.gmra.mxu0 %v175
    %v258 = vpop.f32.mrf.mxu0
    %v259 = vadd.f32 0.0, %v258
    %v260 = vpop.f32.mrf.mxu0
    %v261 = vpop.f32.mrf.mxu0
    %v262 = vpop.f32.mrf.mxu0
    %263 = vdwg.mxu0
    %v264 = vrot.slane %v259, 4
    %v265 = vadd.f32 %v259, %v264
    %v266 = vrot.slane %v265, 2
    %v267 = vadd.f32 %v265, %v266
    %v268 = vrot.slane %v267, 1
    %v269 = vadd.f32 %v267, %v268
    %v270 = vrcp.pop 8.0
    %v271 = vmul.f32 %v269, %v270
    %v272 = vmul.f32 %v259, %v259
    %v273 = vrot.slane %v272, 4
    %v274 = vadd.f32 %v272, %v273
    %v275 = vrot.slane %v274, 2
    %v276 = vadd.f32 %v274, %v275
    %v277 = vrot.slane %v276, 1
    %v278 = vadd.f32 %v276, %v277
    %v279 = vmul.f32 %v278, %v270
    %v280 = vmul.f32 %v271, %v271
    %v281 = vsub.f32 %v279, %v280
    %v282 = vmax.f32 %v281, 0.0
    %v283 = vsub.f32 %v259, %v271
    %v284 = vadd.f32 %v282, 1e-05
    %v285 = vrsqrt.pop %v284
    %v286 = vmul.f32 %v283, %v285
    %v287 = vlaneseq
    %v288 = vshrl.u32 %v287, 7
    %v289 = vsub.s32 0, %v288
    %v290 = vrot.slane %v70, %v289
    %v291 = vmul.f32 %v286, %v290
    %v292 = vlaneseq
    %v293 = vshrl.u32 %v292, 7
    %v294 = vsub.s32 1, %v293
    %v295 = vrot.slane %v70, %v294
    %v296 = vadd.f32 %v291, %v295
    %v297 = vmax.f32 %v296, 0.0
    %v298 = vpack.c.bf16 %v297, %v297
    %v315 = vunpack.c.l.b16 %v159
    %v316 = vunpack.c.l.b16 %v160
    %v317 = vunpack.c.l.b16 %v161
    %v318 = vunpack.c.l.b16 %v162
    %v319 = vunpack.c.l.b16 %v163
    %v320 = vunpack.c.l.b16 %v164
    %v321 = vunpack.c.l.b16 %v165
    %v322 = vunpack.c.l.b16 %v166
    %v323 = vunpack.c.l.b16 %v167
    %v324 = vunpack.c.l.b16 %v168
    %v325 = vunpack.c.l.b16 %v169
    %v326 = vunpack.c.l.b16 %v170
    %v327 = vunpack.c.l.b16 %v171
    %v328 = vunpack.c.l.b16 %v172
    %v329 = vunpack.c.l.b16 %v173
    %v330 = vunpack.c.l.b16 %v174
    %v331 = vpack.c.b16 %v316, %v315
    %v332 = vpack.c.b16 %v318, %v317
    %v333 = vpack.c.b16 %v320, %v319
    %v334 = vpack.c.b16 %v322, %v321
    %v335 = vpack.c.b16 %v324, %v323
    %v336 = vpack.c.b16 %v326, %v325
    %v337 = vpack.c.b16 %v328, %v327
    %v338 = vpack.c.b16 %v330, %v329
    %347 = vmatprep.subr.bf16.mxu0 0
    %348 = vmatpush1.bf16.msra.mxu0 %v338
    %349 = vmatprep.subr.bf16.mxu0 0
    %350 = vmatpush1.bf16.msra.mxu0 %v337
    %351 = vmatprep.subr.bf16.mxu0 0
    %352 = vmatpush1.bf16.msra.mxu0 %v336
    %353 = vmatprep.subr.bf16.mxu0 0
    %354 = vmatpush1.bf16.msra.mxu0 %v335
    %355 = vmatprep.subr.bf16.mxu0 0
    %356 = vmatpush1.bf16.msra.mxu0 %v334
    %357 = vmatprep.subr.bf16.mxu0 0
    %358 = vmatpush1.bf16.msra.mxu0 %v333
    %359 = vmatprep.subr.bf16.mxu0 0
    %360 = vmatpush1.bf16.msra.mxu0 %v332
    %361 = vmatprep.subr.bf16.mxu0 0
    %362 = vmatpush1.bf16.msra.mxu0 %v331
    %363 = vmatprep.subr.bf16.mxu0 0
    %364 = vmatpush2.bf16.msra.mxu0 0
    %365 = vmatprep.subr.bf16.mxu0 0
    %366 = vmatpush2.bf16.msra.mxu0 0
    %367 = vmatprep.subr.bf16.mxu0 0
    %368 = vmatpush2.bf16.msra.mxu0 0
    %369 = vmatprep.subr.bf16.mxu0 0
    %370 = vmatpush2.bf16.msra.mxu0 0
    %371 = vmatprep.subr.bf16.mxu0 0
    %372 = vmatpush2.bf16.msra.mxu0 0
    %373 = vmatprep.subr.bf16.mxu0 0
    %374 = vmatpush2.bf16.msra.mxu0 0
    %375 = vmatprep.subr.bf16.mxu0 0
    %376 = vmatpush2.bf16.msra.mxu0 0
    %377 = vmatprep.subr.bf16.mxu0 0
    %378 = vmatpush2.bf16.msra.mxu0 0
    %379 = vmatprep.mubr.bf16.mxu0 0
    %380 = vmatmul.mubr.bf16.gmra.mxu0 %v298
    %v381 = vpop.f32.mrf.mxu0
    %v382 = vadd.f32 0.0, %v381
    %v383 = vpop.f32.mrf.mxu0
    %v384 = vpop.f32.mrf.mxu0
    %v385 = vpop.f32.mrf.mxu0
    %386 = vdwg.mxu0
    %v387 = vrot.slane %v382, 4
    %v388 = vadd.f32 %v382, %v387
    %v389 = vrot.slane %v388, 2
    %v390 = vadd.f32 %v388, %v389
    %v391 = vrot.slane %v390, 1
    %v392 = vadd.f32 %v390, %v391
    %v393 = vmul.f32 %v392, %v270
    %v394 = vmul.f32 %v382, %v382
    %v395 = vrot.slane %v394, 4
    %v396 = vadd.f32 %v394, %v395
    %v397 = vrot.slane %v396, 2
    %v398 = vadd.f32 %v396, %v397
    %v399 = vrot.slane %v398, 1
    %v400 = vadd.f32 %v398, %v399
    %v401 = vmul.f32 %v400, %v270
    %v402 = vmul.f32 %v393, %v393
    %v403 = vsub.f32 %v401, %v402
    %v404 = vmax.f32 %v403, 0.0
    %v405 = vsub.f32 %v382, %v393
    %v406 = vadd.f32 %v404, 1e-05
    %v407 = vrsqrt.pop %v406
    %v408 = vmul.f32 %v405, %v407
    %v409 = vlaneseq
    %v410 = vshrl.u32 %v409, 7
    %v411 = vsub.s32 2, %v410
    %v412 = vrot.slane %v70, %v411
    %v413 = vmul.f32 %v408, %v412
    %v414 = vlaneseq
    %v415 = vshrl.u32 %v414, 7
    %v416 = vsub.s32 3, %v415
    %v417 = vrot.slane %v70, %v416
    %v418 = vadd.f32 %v413, %v417
    %v419 = vmax.f32 %v418, 0.0
    %s420 = scalar_lea.vmem [#allocation6], 128
    %v421 = vld [vmem:[%s420] sm:$0xf]
    %v422 = vld [vmem:[%s420 + $0x4] sm:$0xf]
    %v423 = vld [vmem:[%s420 + $0x8] sm:$0xf]
    %v424 = vld [vmem:[%s420 + $0xc] sm:$0xf]
    %v425 = vld [vmem:[%s420 + $0x10] sm:$0xf]
    %v426 = vld [vmem:[%s420 + $0x14] sm:$0xf]
    %v427 = vld [vmem:[%s420 + $0x18] sm:$0xf]
    %v428 = vld [vmem:[%s420 + $0x1c] sm:$0xf]
    %v429 = vld [vmem:[%s420 + $0x20] sm:$0xf]
    %v430 = vld [vmem:[%s420 + $0x24] sm:$0xf]
    %v431 = vld [vmem:[%s420 + $0x28] sm:$0xf]
    %v432 = vld [vmem:[%s420 + $0x2c] sm:$0xf]
    %v433 = vld [vmem:[%s420 + $0x30] sm:$0xf]
    %v434 = vld [vmem:[%s420 + $0x34] sm:$0xf]
    %v435 = vld [vmem:[%s420 + $0x38] sm:$0xf]
    %v436 = vld [vmem:[%s420 + $0x3c] sm:$0xf]
    %s437 = scalar_lea.vmem [#allocation6], 192
    %v438 = vld [vmem:[%s437] sm:$0xf]
    %v439 = vld [vmem:[%s437 + $0x4] sm:$0xf]
    %v440 = vld [vmem:[%s437 + $0x8] sm:$0xf]
    %v441 = vld [vmem:[%s437 + $0xc] sm:$0xf]
    %v442 = vld [vmem:[%s437 + $0x10] sm:$0xf]
    %v443 = vld [vmem:[%s437 + $0x14] sm:$0xf]
    %v444 = vld [vmem:[%s437 + $0x18] sm:$0xf]
    %v445 = vld [vmem:[%s437 + $0x1c] sm:$0xf]
    %v446 = vld [vmem:[%s437 + $0x20] sm:$0xf]
    %v447 = vld [vmem:[%s437 + $0x24] sm:$0xf]
    %v448 = vld [vmem:[%s437 + $0x28] sm:$0xf]
    %v449 = vld [vmem:[%s437 + $0x2c] sm:$0xf]
    %v450 = vld [vmem:[%s437 + $0x30] sm:$0xf]
    %v451 = vld [vmem:[%s437 + $0x34] sm:$0xf]
    %v452 = vld [vmem:[%s437 + $0x38] sm:$0xf]
    %v453 = vld [vmem:[%s437 + $0x3c] sm:$0xf]
    %v454 = vpack.c.bf16 %v419, %v419
    %v471 = vunpack.c.l.b16 %v421
    %v472 = vunpack.c.l.b16 %v422
    %v473 = vunpack.c.l.b16 %v423
    %v474 = vunpack.c.l.b16 %v424
    %v475 = vunpack.c.l.b16 %v425
    %v476 = vunpack.c.l.b16 %v426
    %v477 = vunpack.c.l.b16 %v427
    %v478 = vunpack.c.l.b16 %v428
    %v479 = vunpack.c.l.b16 %v429
    %v480 = vunpack.c.l.b16 %v430
    %v481 = vunpack.c.l.b16 %v431
    %v482 = vunpack.c.l.b16 %v432
    %v483 = vunpack.c.l.b16 %v433
    %v484 = vunpack.c.l.b16 %v434
    %v485 = vunpack.c.l.b16 %v435
    %v486 = vunpack.c.l.b16 %v436
    %v487 = vpack.c.b16 %v472, %v471
    %v488 = vpack.c.b16 %v474, %v473
    %v489 = vpack.c.b16 %v476, %v475
    %v490 = vpack.c.b16 %v478, %v477
    %v491 = vpack.c.b16 %v480, %v479
    %v492 = vpack.c.b16 %v482, %v481
    %v493 = vpack.c.b16 %v484, %v483
    %v494 = vpack.c.b16 %v486, %v485
    %503 = vmatprep.subr.bf16.mxu0 0
    %504 = vmatpush1.bf16.msra.mxu0 %v494
    %505 = vmatprep.subr.bf16.mxu0 0
    %506 = vmatpush1.bf16.msra.mxu0 %v493
    %507 = vmatprep.subr.bf16.mxu0 0
    %508 = vmatpush1.bf16.msra.mxu0 %v492
    %509 = vmatprep.subr.bf16.mxu0 0
    %510 = vmatpush1.bf16.msra.mxu0 %v491
    %511 = vmatprep.subr.bf16.mxu0 0
    %512 = vmatpush1.bf16.msra.mxu0 %v490
    %513 = vmatprep.subr.bf16.mxu0 0
    %514 = vmatpush1.bf16.msra.mxu0 %v489
    %515 = vmatprep.subr.bf16.mxu0 0
    %516 = vmatpush1.bf16.msra.mxu0 %v488
    %517 = vmatprep.subr.bf16.mxu0 0
    %518 = vmatpush1.bf16.msra.mxu0 %v487
    %519 = vmatprep.subr.bf16.mxu0 0
    %520 = vmatpush2.bf16.msra.mxu0 0
    %521 = vmatprep.subr.bf16.mxu0 0
    %522 = vmatpush2.bf16.msra.mxu0 0
    %523 = vmatprep.subr.bf16.mxu0 0
    %524 = vmatpush2.bf16.msra.mxu0 0
    %525 = vmatprep.subr.bf16.mxu0 0
    %526 = vmatpush2.bf16.msra.mxu0 0
    %527 = vmatprep.subr.bf16.mxu0 0
    %528 = vmatpush2.bf16.msra.mxu0 0
    %529 = vmatprep.subr.bf16.mxu0 0
    %530 = vmatpush2.bf16.msra.mxu0 0
    %531 = vmatprep.subr.bf16.mxu0 0
    %532 = vmatpush2.bf16.msra.mxu0 0
    %533 = vmatprep.subr.bf16.mxu0 0
    %534 = vmatpush2.bf16.msra.mxu0 0
    %535 = vmatprep.mubr.bf16.mxu0 0
    %536 = vmatmul.mubr.bf16.gmra.mxu0 %v454
    %v537 = vpop.f32.mrf.mxu0
    %v538 = vadd.f32 0.0, %v537
    %v539 = vpop.f32.mrf.mxu0
    %v540 = vpop.f32.mrf.mxu0
    %v541 = vpop.f32.mrf.mxu0
    %542 = vdwg.mxu0
    %v543 = vrot.slane %v538, 4
    %v544 = vadd.f32 %v538, %v543
    %v545 = vrot.slane %v544, 2
    %v546 = vadd.f32 %v544, %v545
    %v547 = vrot.slane %v546, 1
    %v548 = vadd.f32 %v546, %v547
    %v549 = vmul.f32 %v548, %v270
    %v550 = vmul.f32 %v538, %v538
    %v551 = vrot.slane %v550, 4
    %v552 = vadd.f32 %v550, %v551
    %v553 = vrot.slane %v552, 2
    %v554 = vadd.f32 %v552, %v553
    %v555 = vrot.slane %v554, 1
    %v556 = vadd.f32 %v554, %v555
    %v557 = vmul.f32 %v556, %v270
    %v558 = vmul.f32 %v549, %v549
    %v559 = vsub.f32 %v557, %v558
    %v560 = vmax.f32 %v559, 0.0
    %v561 = vsub.f32 %v538, %v549
    %v562 = vadd.f32 %v560, 1e-05
    %v563 = vrsqrt.pop %v562
    %v564 = vmul.f32 %v561, %v563
    %v565 = vlaneseq
    %v566 = vshrl.u32 %v565, 7
    %v567 = vsub.s32 4, %v566
    %v568 = vrot.slane %v70, %v567
    %v569 = vmul.f32 %v564, %v568
    %v570 = vlaneseq
    %v571 = vshrl.u32 %v570, 7
    %v572 = vsub.s32 5, %v571
    %v573 = vrot.slane %v70, %v572
    %v574 = vadd.f32 %v569, %v573
    %v575 = vmax.f32 %v574, 0.0
    %v576 = vpack.c.bf16 %v575, %v575
    %v593 = vunpack.c.l.b16 %v438
    %v594 = vunpack.c.l.b16 %v439
    %v595 = vunpack.c.l.b16 %v440
    %v596 = vunpack.c.l.b16 %v441
    %v597 = vunpack.c.l.b16 %v442
    %v598 = vunpack.c.l.b16 %v443
    %v599 = vunpack.c.l.b16 %v444
    %v600 = vunpack.c.l.b16 %v445
    %v601 = vunpack.c.l.b16 %v446
    %v602 = vunpack.c.l.b16 %v447
    %v603 = vunpack.c.l.b16 %v448
    %v604 = vunpack.c.l.b16 %v449
    %v605 = vunpack.c.l.b16 %v450
    %v606 = vunpack.c.l.b16 %v451
    %v607 = vunpack.c.l.b16 %v452
    %v608 = vunpack.c.l.b16 %v453
    %v609 = vpack.c.b16 %v594, %v593
    %v610 = vpack.c.b16 %v596, %v595
    %v611 = vpack.c.b16 %v598, %v597
    %v612 = vpack.c.b16 %v600, %v599
    %v613 = vpack.c.b16 %v602, %v601
    %v614 = vpack.c.b16 %v604, %v603
    %v615 = vpack.c.b16 %v606, %v605
    %v616 = vpack.c.b16 %v608, %v607
    %625 = vmatprep.subr.bf16.mxu0 0
    %626 = vmatpush1.bf16.msra.mxu0 %v616
    %627 = vmatprep.subr.bf16.mxu0 0
    %628 = vmatpush1.bf16.msra.mxu0 %v615
    %629 = vmatprep.subr.bf16.mxu0 0
    %630 = vmatpush1.bf16.msra.mxu0 %v614
    %631 = vmatprep.subr.bf16.mxu0 0
    %632 = vmatpush1.bf16.msra.mxu0 %v613
    %633 = vmatprep.subr.bf16.mxu0 0
    %634 = vmatpush1.bf16.msra.mxu0 %v612
    %635 = vmatprep.subr.bf16.mxu0 0
    %636 = vmatpush1.bf16.msra.mxu0 %v611
    %637 = vmatprep.subr.bf16.mxu0 0
    %638 = vmatpush1.bf16.msra.mxu0 %v610
    %639 = vmatprep.subr.bf16.mxu0 0
    %640 = vmatpush1.bf16.msra.mxu0 %v609
    %641 = vmatprep.subr.bf16.mxu0 0
    %642 = vmatpush2.bf16.msra.mxu0 0
    %643 = vmatprep.subr.bf16.mxu0 0
    %644 = vmatpush2.bf16.msra.mxu0 0
    %645 = vmatprep.subr.bf16.mxu0 0
    %646 = vmatpush2.bf16.msra.mxu0 0
    %647 = vmatprep.subr.bf16.mxu0 0
    %648 = vmatpush2.bf16.msra.mxu0 0
    %649 = vmatprep.subr.bf16.mxu0 0
    %650 = vmatpush2.bf16.msra.mxu0 0
    %651 = vmatprep.subr.bf16.mxu0 0
    %652 = vmatpush2.bf16.msra.mxu0 0
    %653 = vmatprep.subr.bf16.mxu0 0
    %654 = vmatpush2.bf16.msra.mxu0 0
    %655 = vmatprep.subr.bf16.mxu0 0
    %656 = vmatpush2.bf16.msra.mxu0 0
    %657 = vmatprep.mubr.bf16.mxu0 0
    %658 = vmatmul.mubr.bf16.gmra.mxu0 %v576
    %v659 = vpop.f32.mrf.mxu0
    %v660 = vadd.f32 0.0, %v659
    %v661 = vpop.f32.mrf.mxu0
    %v662 = vpop.f32.mrf.mxu0
    %v663 = vpop.f32.mrf.mxu0
    %664 = vdwg.mxu0
    %v665 = vrot.slane %v660, 4
    %v666 = vadd.f32 %v660, %v665
    %v667 = vrot.slane %v666, 2
    %v668 = vadd.f32 %v666, %v667
    %v669 = vrot.slane %v668, 1
    %v670 = vadd.f32 %v668, %v669
    %v671 = vmul.f32 %v670, %v270
    %v672 = vmul.f32 %v660, %v660
    %v673 = vrot.slane %v672, 4
    %v674 = vadd.f32 %v672, %v673
    %v675 = vrot.slane %v674, 2
    %v676 = vadd.f32 %v674, %v675
    %v677 = vrot.slane %v676, 1
    %v678 = vadd.f32 %v676, %v677
    %v679 = vmul.f32 %v678, %v270
    %v680 = vmul.f32 %v671, %v671
    %v681 = vsub.f32 %v679, %v680
    %v682 = vmax.f32 %v681, 0.0
    %v683 = vsub.f32 %v660, %v671
    %v684 = vadd.f32 %v682, 1e-05
    %v685 = vrsqrt.pop %v684
    %v686 = vmul.f32 %v683, %v685
    %v687 = vlaneseq
    %v688 = vshrl.u32 %v687, 7
    %v689 = vsub.s32 6, %v688
    %v690 = vrot.slane %v70, %v689
    %v691 = vmul.f32 %v686, %v690
    %v692 = vlaneseq
    %v693 = vshrl.u32 %v692, 7
    %v694 = vsub.s32 7, %v693
    %v695 = vrot.slane %v70, %v694
    %v696 = vadd.f32 %v691, %v695
    %v697 = vmax.f32 %v696, 0.0
    %v698 = vlaneseq
    %v699 = vshrl.u32 %v698, 7
    %v700 = vadd.s32 %v699, 8
    %v701 = vadd.s32 %v699, 16
    %v702 = vadd.s32 %v699, 24
    %v703 = vadd.s32 %v699, 32
    %v704 = vadd.s32 %v699, 40
    %v705 = vadd.s32 %v699, 48
    %v706 = vadd.s32 %v699, 56
    %v707 = vadd.s32 %v699, 64
    %v708 = vadd.s32 %v699, 72
    %v709 = vadd.s32 %v699, 80
    %v710 = vadd.s32 %v699, 88
    %v711 = vadd.s32 %v699, 96
    %v712 = vadd.s32 %v699, 104
    %v713 = vadd.s32 %v699, 112
    %v714 = vadd.s32 %v699, 120
    %v715 = vlaneseq
    %v716 = vand.u32 %v715, 127
    %vm717 = vcmp.eq.s32.totalorder %v699, %v716
    %vm718 = vcmp.eq.s32.totalorder %v700, %v716
    %vm719 = vcmp.eq.s32.totalorder %v701, %v716
    %vm720 = vcmp.eq.s32.totalorder %v702, %v716
    %vm721 = vcmp.eq.s32.totalorder %v703, %v716
    %vm722 = vcmp.eq.s32.totalorder %v704, %v716
    %vm723 = vcmp.eq.s32.totalorder %v705, %v716
    %vm724 = vcmp.eq.s32.totalorder %v706, %v716
    %vm725 = vcmp.eq.s32.totalorder %v707, %v716
    %vm726 = vcmp.eq.s32.totalorder %v708, %v716
    %vm727 = vcmp.eq.s32.totalorder %v709, %v716
    %vm728 = vcmp.eq.s32.totalorder %v710, %v716
    %vm729 = vcmp.eq.s32.totalorder %v711, %v716
    %vm730 = vcmp.eq.s32.totalorder %v712, %v716
    %vm731 = vcmp.eq.s32.totalorder %v713, %v716
    %vm732 = vcmp.eq.s32.totalorder %v714, %v716
    %v733 = vsel %vm717, 1, 0
    %v734 = vsel %vm718, 1, 0
    %v735 = vsel %vm719, 1, 0
    %v736 = vsel %vm720, 1, 0
    %v737 = vsel %vm721, 1, 0
    %v738 = vsel %vm722, 1, 0
    %v739 = vsel %vm723, 1, 0
    %v740 = vsel %vm724, 1, 0
    %v741 = vsel %vm725, 1, 0
    %v742 = vsel %vm726, 1, 0
    %v743 = vsel %vm727, 1, 0
    %v744 = vsel %vm728, 1, 0
    %v745 = vsel %vm729, 1, 0
    %v746 = vsel %vm730, 1, 0
    %v747 = vsel %vm731, 1, 0
    %v748 = vsel %vm732, 1, 0
    %v749 = vcvt.s32.f32 %v733
    %v750 = vcvt.s32.f32 %v734
    %v751 = vcvt.s32.f32 %v735
    %v752 = vcvt.s32.f32 %v736
    %v753 = vcvt.s32.f32 %v737
    %v754 = vcvt.s32.f32 %v738
    %v755 = vcvt.s32.f32 %v739
    %v756 = vcvt.s32.f32 %v740
    %v757 = vcvt.s32.f32 %v741
    %v758 = vcvt.s32.f32 %v742
    %v759 = vcvt.s32.f32 %v743
    %v760 = vcvt.s32.f32 %v744
    %v761 = vcvt.s32.f32 %v745
    %v762 = vcvt.s32.f32 %v746
    %v763 = vcvt.s32.f32 %v747
    %v764 = vcvt.s32.f32 %v748
    %765 = vmatprep.subr.mxu0 0.0
    %766 = vmatpush1.xpose.msra.mxu0 0.0
    %767 = vmatprep.subr.mxu0 0.0
    %768 = vmatpush1.xpose.msra.mxu0 0.0
    %769 = vmatprep.subr.mxu0 0.0
    %770 = vmatpush1.xpose.msra.mxu0 0.0
    %771 = vmatprep.subr.mxu0 0.0
    %772 = vmatpush1.xpose.msra.mxu0 0.0
    %773 = vmatprep.subr.mxu0 0.0
    %774 = vmatpush1.xpose.msra.mxu0 0.0
    %775 = vmatprep.subr.mxu0 0.0
    %776 = vmatpush1.xpose.msra.mxu0 0.0
    %777 = vmatprep.subr.mxu0 0.0
    %778 = vmatpush1.xpose.msra.mxu0 0.0
    %779 = vmatprep.subr.mxu0 0.0
    %780 = vmatpush1.xpose.msra.mxu0 0.0
    %781 = vmatprep.subr.mxu0 0.0
    %782 = vmatpush1.xpose.msra.mxu0 0.0
    %783 = vmatprep.subr.mxu0 0.0
    %784 = vmatpush1.xpose.msra.mxu0 0.0
    %785 = vmatprep.subr.mxu0 0.0
    %786 = vmatpush1.xpose.msra.mxu0 0.0
    %787 = vmatprep.subr.mxu0 0.0
    %788 = vmatpush1.xpose.msra.mxu0 0.0
    %789 = vmatprep.subr.mxu0 0.0
    %790 = vmatpush1.xpose.msra.mxu0 0.0
    %791 = vmatprep.subr.mxu0 0.0
    %792 = vmatpush1.xpose.msra.mxu0 0.0
    %793 = vmatprep.subr.mxu0 0.0
    %794 = vmatpush1.xpose.msra.mxu0 0.0
    %795 = vmatprep.subr.mxu0 0.0
    %796 = vmatpush1.xpose.msra.mxu0 %v697
    %797 = vmatprep.subr.mxu0 0.0
    %798 = vmatpush2.xpose.msra.mxu0 0.0
    %799 = vmatprep.subr.mxu0 0.0
    %800 = vmatpush2.xpose.msra.mxu0 0.0
    %801 = vmatprep.subr.mxu0 0.0
    %802 = vmatpush2.xpose.msra.mxu0 0.0
    %803 = vmatprep.subr.mxu0 0.0
    %804 = vmatpush2.xpose.msra.mxu0 0.0
    %805 = vmatprep.subr.mxu0 0.0
    %806 = vmatpush2.xpose.msra.mxu0 0.0
    %807 = vmatprep.subr.mxu0 0.0
    %808 = vmatpush2.xpose.msra.mxu0 0.0
    %809 = vmatprep.subr.mxu0 0.0
    %810 = vmatpush2.xpose.msra.mxu0 0.0
    %811 = vmatprep.subr.mxu0 0.0
    %812 = vmatpush2.xpose.msra.mxu0 0.0
    %813 = vmatprep.subr.mxu0 0.0
    %814 = vmatpush2.xpose.msra.mxu0 0.0
    %815 = vmatprep.subr.mxu0 0.0
    %816 = vmatpush2.xpose.msra.mxu0 0.0
    %817 = vmatprep.subr.mxu0 0.0
    %818 = vmatpush2.xpose.msra.mxu0 0.0
    %819 = vmatprep.subr.mxu0 0.0
    %820 = vmatpush2.xpose.msra.mxu0 0.0
    %821 = vmatprep.subr.mxu0 0.0
    %822 = vmatpush2.xpose.msra.mxu0 0.0
    %823 = vmatprep.subr.mxu0 0.0
    %824 = vmatpush2.xpose.msra.mxu0 0.0
    %825 = vmatprep.subr.mxu0 0.0
    %826 = vmatpush2.xpose.msra.mxu0 0.0
    %827 = vmatprep.subr.mxu0 0.0
    %828 = vmatpush2.xpose.msra.mxu0 0.0
    %829 = vmatprep.mubr.f32.mxu0 0.0
    %830 = vmatmul.mubr.f32.gmra.mxu0 %v749
    %v831 = vpop.f32.mrf.mxu0
    %v832 = vadd.f32 0.0, %v831
    %v833 = vpop.f32.mrf.mxu0
    %834 = vmatprep.mubr.f32.mxu0 0.0
    %835 = vmatmul.mubr.f32.gmra.mxu0 %v750
    %v836 = vpop.f32.mrf.mxu0
    %v837 = vadd.f32 0.0, %v836
    %v838 = vpop.f32.mrf.mxu0
    %839 = vmatprep.mubr.f32.mxu0 0.0
    %840 = vmatmul.mubr.f32.gmra.mxu0 %v751
    %v841 = vpop.f32.mrf.mxu0
    %v842 = vadd.f32 0.0, %v841
    %v843 = vpop.f32.mrf.mxu0
    %844 = vmatprep.mubr.f32.mxu0 0.0
    %845 = vmatmul.mubr.f32.gmra.mxu0 %v752
    %v846 = vpop.f32.mrf.mxu0
    %v847 = vadd.f32 0.0, %v846
    %v848 = vpop.f32.mrf.mxu0
    %849 = vmatprep.mubr.f32.mxu0 0.0
    %850 = vmatmul.mubr.f32.gmra.mxu0 %v753
    %v851 = vpop.f32.mrf.mxu0
    %v852 = vadd.f32 0.0, %v851
    %v853 = vpop.f32.mrf.mxu0
    %854 = vmatprep.mubr.f32.mxu0 0.0
    %855 = vmatmul.mubr.f32.gmra.mxu0 %v754
    %v856 = vpop.f32.mrf.mxu0
    %v857 = vadd.f32 0.0, %v856
    %v858 = vpop.f32.mrf.mxu0
    %859 = vmatprep.mubr.f32.mxu0 0.0
    %860 = vmatmul.mubr.f32.gmra.mxu0 %v755
    %v861 = vpop.f32.mrf.mxu0
    %v862 = vadd.f32 0.0, %v861
    %v863 = vpop.f32.mrf.mxu0
    %864 = vmatprep.mubr.f32.mxu0 0.0
    %865 = vmatmul.mubr.f32.gmra.mxu0 %v756
    %v866 = vpop.f32.mrf.mxu0
    %v867 = vadd.f32 0.0, %v866
    %v868 = vpop.f32.mrf.mxu0
    %869 = vmatprep.mubr.f32.mxu0 0.0
    %870 = vmatmul.mubr.f32.gmra.mxu0 %v757
    %v871 = vpop.f32.mrf.mxu0
    %v872 = vadd.f32 0.0, %v871
    %v873 = vpop.f32.mrf.mxu0
    %874 = vmatprep.mubr.f32.mxu0 0.0
    %875 = vmatmul.mubr.f32.gmra.mxu0 %v758
    %v876 = vpop.f32.mrf.mxu0
    %v877 = vadd.f32 0.0, %v876
    %v878 = vpop.f32.mrf.mxu0
    %879 = vmatprep.mubr.f32.mxu0 0.0
    %880 = vmatmul.mubr.f32.gmra.mxu0 %v759
    %v881 = vpop.f32.mrf.mxu0
    %v882 = vadd.f32 0.0, %v881
    %v883 = vpop.f32.mrf.mxu0
    %884 = vmatprep.mubr.f32.mxu0 0.0
    %885 = vmatmul.mubr.f32.gmra.mxu0 %v760
    %v886 = vpop.f32.mrf.mxu0
    %v887 = vadd.f32 0.0, %v886
    %v888 = vpop.f32.mrf.mxu0
    %889 = vmatprep.mubr.f32.mxu0 0.0
    %890 = vmatmul.mubr.f32.gmra.mxu0 %v761
    %v891 = vpop.f32.mrf.mxu0
    %v892 = vadd.f32 0.0, %v891
    %v893 = vpop.f32.mrf.mxu0
    %894 = vmatprep.mubr.f32.mxu0 0.0
    %895 = vmatmul.mubr.f32.gmra.mxu0 %v762
    %v896 = vpop.f32.mrf.mxu0
    %v897 = vadd.f32 0.0, %v896
    %v898 = vpop.f32.mrf.mxu0
    %899 = vmatprep.mubr.f32.mxu0 0.0
    %900 = vmatmul.mubr.f32.gmra.mxu0 %v763
    %v901 = vpop.f32.mrf.mxu0
    %v902 = vadd.f32 0.0, %v901
    %v903 = vpop.f32.mrf.mxu0
    %904 = vmatprep.mubr.f32.mxu0 0.0
    %905 = vmatmul.mubr.f32.gmra.mxu0 %v764
    %v906 = vpop.f32.mrf.mxu0
    %v907 = vadd.f32 0.0, %v906
    %v908 = vpop.f32.mrf.mxu0
    %909 = vdwg.mxu0
    %vm910 = vcmask 64512
    %911 = vst.msk [vmem:[%s3] sm:$0xff] %vm910, %v832
    %912 = vst.msk [vmem:[%s3 + $0x8] sm:$0xff] %vm910, %v837
    %913 = vst.msk [vmem:[%s3 + $0x10] sm:$0xff] %vm910, %v842
    %914 = vst.msk [vmem:[%s3 + $0x18] sm:$0xff] %vm910, %v847
    %915 = vst.msk [vmem:[%s3 + $0x20] sm:$0xff] %vm910, %v852
    %916 = vst.msk [vmem:[%s3 + $0x28] sm:$0xff] %vm910, %v857
    %917 = vst.msk [vmem:[%s3 + $0x30] sm:$0xff] %vm910, %v862
    %918 = vst.msk [vmem:[%s3 + $0x38] sm:$0xff] %vm910, %v867
    %919 = vst.msk [vmem:[%s3 + $0x40] sm:$0xff] %vm910, %v872
    %920 = vst.msk [vmem:[%s3 + $0x48] sm:$0xff] %vm910, %v877
    %921 = vst.msk [vmem:[%s3 + $0x50] sm:$0xff] %vm910, %v882
    %922 = vst.msk [vmem:[%s3 + $0x58] sm:$0xff] %vm910, %v887
    %923 = vst.msk [vmem:[%s3 + $0x60] sm:$0xff] %vm910, %v892
    %924 = vst.msk [vmem:[%s3 + $0x68] sm:$0xff] %vm910, %v897
    %925 = vst.msk [vmem:[%s3 + $0x70] sm:$0xff] %vm910, %v902
    %926 = vst.msk [vmem:[%s3 + $0x78] sm:$0xff] %vm910, %v907
    // Predicated region
    $region26: #{_gin_forward_device.1} parent=1 // pred_check
      _
    $region27: #{_gin_forward_device.1} parent=1 // pred_check_branch
      %928 = sbr.rel (0) target = $region29
    $region28: #{_gin_forward_device.1} parent=1 // pred_region
      _
    $region29: #{_gin_forward_device.1} parent=1 // pred_fallthru
      _
    // Predicated region
    $region30: #{_gin_forward_device.1} parent=1 // pred_check
      _
    $region31: #{_gin_forward_device.1} parent=1 // pred_check_branch
      %930 = sbr.rel (0) target = $region33
    $region32: #{_gin_forward_device.1} parent=1 // pred_region
      _
    $region33: #{_gin_forward_device.1} parent=1 // pred_fallthru
      _
    %931 = vsyncpa [#allocation3], 1
    %932 = vsyncpa [#allocation5], 1

</llo_original>
